<compile_context>
chip_gen: v6e
topology: v6e:2x2x1
jax: 0.10.0
libtpu: 0.0.40
codegen_flags: <defaults>
</compile_context>

<pallas_src>
import numpy as np
import jax
import jax.numpy as jnp
from jax.experimental import pallas as pl
from jax.experimental.pallas import tpu as pltpu


def _round_up(x, m):
    return ((x + m - 1) // m) * m


def _segment_rowsum_kernel(bs_ref, bt_ref, xs_ref, xt_ref, a_ref, b_ref):
    """grid = (core, node_tile).  Accumulates per-graph row sums of x_src / x_tar
    (each carrying a trailing ones column -> per-graph node counts) into this core's
    lane-dense output slab.  Node-tile axis (axis 1) is the reduction."""
    t = pl.program_id(1)

    @pl.when(t == 0)
    def _():
        a_ref[...] = jnp.zeros_like(a_ref)
        b_ref[...] = jnp.zeros_like(b_ref)

    size_pad = a_ref.shape[0]
    tile = bs_ref.shape[1]

    # One-hot segment matrices for this node tile (padded nodes carry id -1 -> all-zero
    # columns; padded graph rows never match -> all-zero rows).  Built directly in the
    # streaming dtype (bf16) - values 0/1 are exact.
    gid = jax.lax.broadcasted_iota(jnp.int32, (size_pad, tile), 0)
    onehot_s = (gid == bs_ref[...]).astype(xs_ref.dtype)          # [size_pad, tile]
    onehot_t = (gid == bt_ref[...]).astype(xt_ref.dtype)          # [size_pad, tile]

    # Segment row sums via native-bf16 MXU matmuls, f32 accumulation in the output slab.
    a_ref[...] += jnp.dot(onehot_s, xs_ref[...], preferred_element_type=jnp.float32)
    b_ref[...] += jnp.dot(onehot_t, xt_ref[...], preferred_element_type=jnp.float32)


def confusion_attention_forward(x_src, batch_src, x_tar, batch_tar, size=None,
                                compute_dtype=jnp.bfloat16):
    """Pallas wrapper reproducing ConfusionAttentionModule.forward.

    Pass `size` (number of graphs) explicitly: it is known at data-prep time and passing
    it avoids the device->host sync the torch code performs."""
    if size is None:
        # Fallback only (forces a device->host sync, same as the torch reference).
        bs_last = int(batch_src[-1])
        bt_last = int(batch_tar[-1])
        size = bs_last + 1 if bs_last == bt_last else min(bs_last, bt_last) + 1
    size = int(size)

    n_src, d = x_src.shape
    n_tar, d2 = x_tar.shape
    assert d == d2
    dtype_bytes = jnp.dtype(compute_dtype).itemsize

    # ---------------- layout / tiling choices ----------------
    d_pad = _round_up(d + 1, 128)              # features + ones column, lane-dense
    size_pad = max(16, _round_up(size, 16))    # sublane-packed for the bf16 one-hot
    max_n = max(n_src, n_tar)

    # Large node tiles amortize the ~0.35 us/grid-step overhead; cap by a VMEM budget
    # that stays well under the tightest scoped default (v5e: 16 MiB) and v7x's 64 MiB
    # physical VMEM, accounting for double-buffered x streams and one-hot temporaries.
    budget = 10 * 1024 * 1024
    per_node_bytes = 4 * d_pad * dtype_bytes + 2 * size_pad * dtype_bytes
    tile_cap = budget // per_node_bytes
    node_tile = int(min(2048, max(128, (tile_cap // 128) * 128)))
    node_tile = min(node_tile, _round_up(max_n, 128))   # don't exceed what's needed

    total_tiles = pl.cdiv(max_n, node_tile)
    num_cores = 2 if total_tiles >= 2 else 1            # v7x has 2 TCs; harmless on v5e/v6e
    tiles_per_core = pl.cdiv(total_tiles, num_cores)
    n_pad = node_tile * tiles_per_core * num_cores

    # ---------------- data prep (one concat+pad pass per array) ----------------
    def prep_nodes(x, n):
        x = jnp.asarray(x, compute_dtype)
        xo = jnp.concatenate([x, jnp.ones((n, 1), compute_dtype)], axis=1)
        return jnp.pad(xo, ((0, n_pad - n), (0, d_pad - (d + 1))))

    def prep_ids(b, n):
        b = jnp.asarray(b, jnp.int32).reshape(1, -1)
        return jnp.pad(b, ((0, 0), (0, n_pad - n)), constant_values=-1)

    xs = prep_nodes(x_src, n_src)
    xt = prep_nodes(x_tar, n_tar)
    bs = prep_ids(batch_src, n_src)
    bt = prep_ids(batch_tar, n_tar)

    est_vmem = (4 * node_tile * d_pad * dtype_bytes          # x streams, double-buffered
                + 2 * 2 * node_tile * 4                      # id streams, double-buffered
                + 2 * 2 * size_pad * d_pad * 4               # A/B output slabs
                + 2 * size_pad * node_tile * dtype_bytes)    # one-hot temporaries
    vmem_limit = int(min(max(2 * est_vmem, 16 * 1024 * 1024), 32 * 1024 * 1024))

    a_parts, b_parts = pl.pallas_call(
        _segment_rowsum_kernel,
        out_shape=(jax.ShapeDtypeStruct((num_cores * size_pad, d_pad), jnp.float32),
                   jax.ShapeDtypeStruct((num_cores * size_pad, d_pad), jnp.float32)),
        grid=(num_cores, tiles_per_core),
        in_specs=[
            pl.BlockSpec((1, node_tile), lambda c, t: (0, c * tiles_per_core + t)),
            pl.BlockSpec((1, node_tile), lambda c, t: (0, c * tiles_per_core + t)),
            pl.BlockSpec((node_tile, d_pad), lambda c, t: (c * tiles_per_core + t, 0)),
            pl.BlockSpec((node_tile, d_pad), lambda c, t: (c * tiles_per_core + t, 0)),
        ],
        out_specs=(pl.BlockSpec((size_pad, d_pad), lambda c, t: (c, 0)),
                   pl.BlockSpec((size_pad, d_pad), lambda c, t: (c, 0))),
        compiler_params=pltpu.CompilerParams(
            dimension_semantics=("parallel", "arbitrary"),
            vmem_limit_bytes=vmem_limit,
        ),
    )(bs, bt, xs, xt)

    # ------- tiny epilogue: combine per-core partials, form the scores (O(size*d)) -------
    a = a_parts.reshape(num_cores, size_pad, d_pad).sum(axis=0)[:size]
    b = b_parts.reshape(num_cores, size_pad, d_pad).sum(axis=0)[:size]
    n = a[:, d:d + 1]                    # per-graph src node counts (ones column)
    m = b[:, d:d + 1]                    # per-graph tar node counts
    total = jnp.sum(a[:, :d] * b[:, :d], axis=1, keepdims=True)
    # 0/0 -> NaN for empty graphs, matching torch.mean of an empty tensor.
    return (total / (n * m)).astype(jnp.float32)


def init_unused_fc_params(key, dim_size):
    """Deterministic init of self.fc (Linear(2D, 2D//8)->ReLU->Linear(2D//8, 1)->Sigmoid).
    NOT used by forward() in the reference module; created only for shape fidelity."""
    channel = dim_size * 2
    reduction = 8
    k1, k2 = jax.random.split(key, 2)
    return {
        "fc0_w": jax.random.normal(k1, (channel // reduction, channel), jnp.float32) * 0.02,
        "fc0_b": jnp.zeros((channel // reduction,), jnp.float32),
        "fc2_w": jax.random.normal(k2, (1, channel // reduction), jnp.float32) * 0.02,
        "fc2_b": jnp.zeros((1,), jnp.float32),
    }


if __name__ == "__main__":
    key = jax.random.PRNGKey(0)
    k_src, k_tar, k_fc = jax.random.split(key, 3)

    dim_size = 32          # node feature dim
    # PyG-style batch assignment vectors (sorted graph ids per node).
    batch_src_list = [0] * 5 + [1] * 6 + [2] * 5
    batch_tar_list = [0] * 6 + [1] * 4 + [2] * 6
    n_src, n_tar = len(batch_src_list), len(batch_tar_list)

    x_src = jax.random.normal(k_src, (n_src, dim_size), jnp.float32)
    x_tar = jax.random.normal(k_tar, (n_tar, dim_size), jnp.float32)
    batch_src = jnp.array(batch_src_list, dtype=jnp.int32)
    batch_tar = jnp.array(batch_tar_list, dtype=jnp.int32)

    # `size` is known at data-prep time -> no device->host sync inside the forward.
    size = (batch_src_list[-1] + 1 if batch_src_list[-1] == batch_tar_list[-1]
            else min(batch_src_list[-1], batch_tar_list[-1]) + 1)

    _ = init_unused_fc_params(k_fc, dim_size)  # unused in forward (matches reference module)

    out = confusion_attention_forward(x_src, batch_src, x_tar, batch_tar, size=size)
    out = jax.block_until_ready(out)

    # Pure-numpy reference replicating the PyTorch loop, on bf16-rounded inputs
    # (the kernel streams x in bf16; both paths accumulate in f32).
    xs = np.asarray(jnp.asarray(x_src, jnp.bfloat16).astype(jnp.float32))
    xt = np.asarray(jnp.asarray(x_tar, jnp.bfloat16).astype(jnp.float32))
    bs = np.asarray(batch_src)
    bt = np.asarray(batch_tar)
    ref = np.zeros((size, 1), np.float32)
    for i in range(size):
        fs = xs[bs == i, :]
        ft = xt[bt == i, :]
        ref[i, 0] = (fs @ ft.T).reshape(-1).mean()

    assert out.shape == (size, 1) and out.dtype == jnp.float32
    np.testing.assert_allclose(np.asarray(out), ref, rtol=1e-3, atol=1e-4)
    print("KERNEL_OK")
</pallas_src>

<mosaic_0001>
module attributes {stable_mosaic.version = 11 : i64} {
  func.func @_segment_rowsum_kernel(%arg0: i32, %arg1: i32, %arg2: memref<1x128xi32, #tpu.memory_space<vmem>>, %arg3: memref<1x128xi32, #tpu.memory_space<vmem>>, %arg4: memref<128x128xbf16, #tpu.memory_space<vmem>>, %arg5: memref<128x128xbf16, #tpu.memory_space<vmem>>, %arg6: memref<16x128xf32, #tpu.memory_space<vmem>>, %arg7: memref<16x128xf32, #tpu.memory_space<vmem>>) attributes {dimension_semantics = [#tpu.dimension_semantics<parallel>, #tpu.dimension_semantics<arbitrary>], iteration_bounds = array<i64: 1, 1>, scalar_prefetch = 0 : i64, scratch_operands = 0 : i64, tpu.core_type = #tpu.core_type<tc>, window_params = [{transform_indices = @transform_0, window_bounds = array<i64: 1, 128>}, {transform_indices = @transform_1, window_bounds = array<i64: 1, 128>}, {transform_indices = @transform_2, window_bounds = array<i64: 128, 128>}, {transform_indices = @transform_3, window_bounds = array<i64: 128, 128>}, {transform_indices = @transform_4, window_bounds = array<i64: 16, 128>}, {transform_indices = @transform_5, window_bounds = array<i64: 16, 128>}]} {
    %c0_i32 = arith.constant 0 : i32
    %0 = arith.cmpi eq, %arg1, %c0_i32 : i32
    %1 = arith.extui %0 : i1 to i32
    %c0_i32_0 = arith.constant 0 : i32
    %2 = arith.cmpi ne, %1, %c0_i32_0 : i32
    scf.if %2 {
      %cst_17 = arith.constant 0.000000e+00 : f32
      %26 = vector.broadcast %cst_17 : f32 to vector<16x128xf32>
      %c0_18 = arith.constant 0 : index
      %c0_19 = arith.constant 0 : index
      %27 = vector.load %arg6[%c0_18, %c0_19] : memref<16x128xf32, #tpu.memory_space<vmem>>, vector<16x128xf32>
      tpu.vector_store %arg6[%c0_18, %c0_19], %26 {strides = array<i32>} : memref<16x128xf32, #tpu.memory_space<vmem>>, vector<16x128xf32>,
      %cst_20 = arith.constant 0.000000e+00 : f32
      %28 = vector.broadcast %cst_20 : f32 to vector<16x128xf32>
      %c0_21 = arith.constant 0 : index
      %c0_22 = arith.constant 0 : index
      %29 = vector.load %arg7[%c0_21, %c0_22] : memref<16x128xf32, #tpu.memory_space<vmem>>, vector<16x128xf32>
      tpu.vector_store %arg7[%c0_21, %c0_22], %28 {strides = array<i32>} : memref<16x128xf32, #tpu.memory_space<vmem>>, vector<16x128xf32>,
    } else {
    }
    %3 = tpu.iota {dimensions = array<i32: 0>} : vector<16x128xi32>
    %c0 = arith.constant 0 : index
    %c0_1 = arith.constant 0 : index
    %4 = vector.load %arg2[%c0, %c0_1] : memref<1x128xi32, #tpu.memory_space<vmem>>, vector<1x128xi32>
    %5 = vector.broadcast %4 : vector<1x128xi32> to vector<16x128xi32>
    %6 = arith.cmpi eq, %3, %5 : vector<16x128xi32>
    %7 = arith.extui %6 : vector<16x128xi1> to vector<16x128xi32>
    %8 = arith.sitofp %7 : vector<16x128xi32> to vector<16x128xf32>
    %9 = arith.truncf %8 : vector<16x128xf32> to vector<16x128xbf16>
    %c0_2 = arith.constant 0 : index
    %c0_3 = arith.constant 0 : index
    %10 = vector.load %arg3[%c0_2, %c0_3] : memref<1x128xi32, #tpu.memory_space<vmem>>, vector<1x128xi32>
    %11 = vector.broadcast %10 : vector<1x128xi32> to vector<16x128xi32>
    %12 = arith.cmpi eq, %3, %11 : vector<16x128xi32>
    %13 = arith.extui %12 : vector<16x128xi1> to vector<16x128xi32>
    %14 = arith.sitofp %13 : vector<16x128xi32> to vector<16x128xf32>
    %15 = arith.truncf %14 : vector<16x128xf32> to vector<16x128xbf16>
    %c0_4 = arith.constant 0 : index
    %c0_5 = arith.constant 0 : index
    %16 = vector.load %arg6[%c0_4, %c0_5] : memref<16x128xf32, #tpu.memory_space<vmem>>, vector<16x128xf32>
    %c0_6 = arith.constant 0 : index
    %c0_7 = arith.constant 0 : index
    %17 = vector.load %arg4[%c0_6, %c0_7] : memref<128x128xbf16, #tpu.memory_space<vmem>>, vector<128x128xbf16>
    %cst = arith.constant dense<0.000000e+00> : vector<16x128xf32>
    %18 = tpu.matmul %9, %17, %cst {dimension_numbers = #tpu.dot_dimension_numbers<[1], [0], [0], [1], [0, 0, 1, 1], [], []>} : vector<16x128xbf16>, vector<128x128xbf16>, vector<16x128xf32> -> vector<16x128xf32>
    %19 = arith.addf %16, %18 : vector<16x128xf32>
    %c0_8 = arith.constant 0 : index
    %c0_9 = arith.constant 0 : index
    %20 = vector.load %arg6[%c0_8, %c0_9] : memref<16x128xf32, #tpu.memory_space<vmem>>, vector<16x128xf32>
    tpu.vector_store %arg6[%c0_8, %c0_9], %19 {strides = array<i32>} : memref<16x128xf32, #tpu.memory_space<vmem>>, vector<16x128xf32>,
    %c0_10 = arith.constant 0 : index
    %c0_11 = arith.constant 0 : index
    %21 = vector.load %arg7[%c0_10, %c0_11] : memref<16x128xf32, #tpu.memory_space<vmem>>, vector<16x128xf32>
    %c0_12 = arith.constant 0 : index
    %c0_13 = arith.constant 0 : index
    %22 = vector.load %arg5[%c0_12, %c0_13] : memref<128x128xbf16, #tpu.memory_space<vmem>>, vector<128x128xbf16>
    %cst_14 = arith.constant dense<0.000000e+00> : vector<16x128xf32>
    %23 = tpu.matmul %15, %22, %cst_14 {dimension_numbers = #tpu.dot_dimension_numbers<[1], [0], [0], [1], [0, 0, 1, 1], [], []>} : vector<16x128xbf16>, vector<128x128xbf16>, vector<16x128xf32> -> vector<16x128xf32>
    %24 = arith.addf %21, %23 : vector<16x128xf32>
    %c0_15 = arith.constant 0 : index
    %c0_16 = arith.constant 0 : index
    %25 = vector.load %arg7[%c0_15, %c0_16] : memref<16x128xf32, #tpu.memory_space<vmem>>, vector<16x128xf32>
    tpu.vector_store %arg7[%c0_15, %c0_16], %24 {strides = array<i32>} : memref<16x128xf32, #tpu.memory_space<vmem>>, vector<16x128xf32>,
    return
  }
  func.func @transform_0(%arg0: i32, %arg1: i32) -> (i32, i32) {
    %c1_i32 = arith.constant 1 : i32
    %0 = arith.muli %arg0, %c1_i32 : i32
    %1 = arith.addi %0, %arg1 : i32
    %c0_i32 = arith.constant 0 : i32
    %c0_i32_0 = arith.constant 0 : i32
    return %c0_i32, %1 : i32, i32
  }
  func.func @transform_1(%arg0: i32, %arg1: i32) -> (i32, i32) {
    %c1_i32 = arith.constant 1 : i32
    %0 = arith.muli %arg0, %c1_i32 : i32
    %1 = arith.addi %0, %arg1 : i32
    %c0_i32 = arith.constant 0 : i32
    %c0_i32_0 = arith.constant 0 : i32
    return %c0_i32, %1 : i32, i32
  }
  func.func @transform_2(%arg0: i32, %arg1: i32) -> (i32, i32) {
    %c1_i32 = arith.constant 1 : i32
    %0 = arith.muli %arg0, %c1_i32 : i32
    %1 = arith.addi %0, %arg1 : i32
    %c0_i32 = arith.constant 0 : i32
    %c0_i32_0 = arith.constant 0 : i32
    return %1, %c0_i32 : i32, i32
  }
  func.func @transform_3(%arg0: i32, %arg1: i32) -> (i32, i32) {
    %c1_i32 = arith.constant 1 : i32
    %0 = arith.muli %arg0, %c1_i32 : i32
    %1 = arith.addi %0, %arg1 : i32
    %c0_i32 = arith.constant 0 : i32
    %c0_i32_0 = arith.constant 0 : i32
    return %1, %c0_i32 : i32, i32
  }
  func.func @transform_4(%arg0: i32, %arg1: i32) -> (i32, i32) {
    %c0_i32 = arith.constant 0 : i32
    %c0_i32_0 = arith.constant 0 : i32
    return %arg0, %c0_i32 : i32, i32
  }
  func.func @transform_5(%arg0: i32, %arg1: i32) -> (i32, i32) {
    %c0_i32 = arith.constant 0 : i32
    %c0_i32_0 = arith.constant 0 : i32
    return %arg0, %c0_i32 : i32, i32
  }
}

</mosaic_0001>

<llo_original>
// kernel: tpu_custom_call.1
$region0: #{tpu_custom_call.1}
  #allocation0 [shape = 'u32[]', space=smem, size = 0x4, offset = 0x4, fixed_abs, tag = 'smem constant byte address 0x4 - core index']
  #allocation1 [shape = 'u32[144,128]{1,0:T(1,128)}', space=vmem, size = 0x12000, scoped, tag = 'internal scratch']
  %s0 = inlined_call_operand.hbm [shape: s32[1,128], index: 0, kind: input, shape index: {}]
  %s1 = inlined_call_operand.vmem [shape: s32[1,128], index: 1, kind: input, shape index: {}]
  %s2 = inlined_call_operand.hbm [shape: bf16[128,128], index: 2, kind: input, shape index: {}]
  %s3 = inlined_call_operand.hbm [shape: bf16[128,128], index: 3, kind: input, shape index: {}]
  %s4 = inlined_call_operand.hbm [shape: f32[16,128], index: 4, kind: output, shape index: {0}]
  %s5 = inlined_call_operand.hbm [shape: f32[16,128], index: 5, kind: output, shape index: {1}]
  %6 = xla_tuple %s4, %s5
  %s7 = sld [smem:[#allocation0]]
  $region50: #{tpu_custom_call.1} parent=0
    _
  %s9 = ssub.s32 1, %s7
  %s10 = scalar_select 0, %s9, %s7
  $region1: #{tpu_custom_call.1} parent=0
    #allocation2 [shape = 'u8[512]{0}', space=vmem, size = 0x400, scoped, tag = 'input window, operand 0, single buffered']
    #allocation3 [shape = 's32[1]{0}', space=sflag, size = 0x4, scoped, tag = 'scoped memory for tpu_custom_call.1']
    #allocation4 [shape = 's32[1]{0}', space=sflag, size = 0x4, scoped, tag = 'scoped memory for tpu_custom_call.1']
    #allocation5 [shape = 'u8[32768]{0}', space=vmem, size = 0x8000, scoped, tag = 'input window, operand 2, single buffered']
    #allocation6 [shape = 's32[1]{0}', space=sflag, size = 0x4, scoped, tag = 'scoped memory for tpu_custom_call.1']
    #allocation7 [shape = 'u8[32768]{0}', space=vmem, size = 0x8000, scoped, tag = 'input window, operand 3, single buffered']
    #allocation8 [shape = 'u8[8192]{0}', space=vmem, size = 0x2000, scoped, tag = 'output window, operand 0, single buffered']
    #allocation9 [shape = 'u8[8192]{0}', space=vmem, size = 0x2000, scoped, tag = 'output window, operand 1, single buffered']
    #allocation10 [shape = 's32[1]{0}', space=sflag, size = 0x4, scoped, tag = 'scoped memory for tpu_custom_call.1']
    %11 = vsyncpa [#allocation3], 0
    %12 = vsyncpa [#allocation6], 0
    %13 = vsyncpa [#allocation4], 0
    %14 = vsyncpa [#allocation10], 0
    // Predicated region
    $region2: #{tpu_custom_call.1} parent=1 // pred_check
      _
    $region3: #{tpu_custom_call.1} parent=1 // pred_check_branch
      %16 = sbr.rel (0) target = $region5
    $region4: #{tpu_custom_call.1} parent=1 // pred_region
      %s17 = sadd.s32 0, 0
      %s19 = ssub.s32 16, 16
      %20 = vsyncadd [#allocation3], %s19
      %s21 = smul.addr %s17, 16
      %s22 = scalar_lea.hbm %s0, %s21
      %s24 = sshll.u32 [#allocation2], 4
      %s25 = int_to_ptr.vmem [resolvable:$true] %s24
      %27 = dma.hbm_to_vmem [thread:$0]  %s22, 16, %s25, [#allocation3]
    $region5: #{tpu_custom_call.1} parent=1 // pred_fallthru
      _
    // Predicated region
    $region6: #{tpu_custom_call.1} parent=1 // pred_check
      _
    $region7: #{tpu_custom_call.1} parent=1 // pred_check_branch
      %29 = sbr.rel (0) target = $region9
    $region8: #{tpu_custom_call.1} parent=1 // pred_region
      %s30 = sadd.s32 0, 0
      %p31 = scmp.lt.s32.totalorder %s30, 0
      %s32 = scalar_select %p31, %s30, 0
      %s33 = scalar_lea.vmem %s1, %s32
      %s34 = sadd.s32 0, 0
    $region9: #{tpu_custom_call.1} parent=1 // pred_fallthru
      _
    // Predicated region
    $region10: #{tpu_custom_call.1} parent=1 // pred_check
      _
    $region11: #{tpu_custom_call.1} parent=1 // pred_check_branch
      %36 = sbr.rel (0) target = $region13
    $region12: #{tpu_custom_call.1} parent=1 // pred_region
      %s37 = sadd.s32 0, 0
      %s38 = smul.u32 16, %s37
      %s40 = ssub.s32 1024, 1024
      %41 = vsyncadd [#allocation6], %s40
      %s42 = smul.addr %s38, 64
      %s43 = scalar_lea.hbm %s2, %s42
      %s44 = sshll.u32 [#allocation5], 4
      %s45 = int_to_ptr.vmem [resolvable:$true] %s44
      %50 = dma.hbm_to_vmem [thread:$0]  %s43, 1024, %s45, [#allocation6], 64, 64, 4
    $region13: #{tpu_custom_call.1} parent=1 // pred_fallthru
      _
    // Predicated region
    $region14: #{tpu_custom_call.1} parent=1 // pred_check
      _
    $region15: #{tpu_custom_call.1} parent=1 // pred_check_branch
      %52 = sbr.rel (0) target = $region17
    $region16: #{tpu_custom_call.1} parent=1 // pred_region
      %s53 = sadd.s32 0, 0
      %s54 = smul.u32 16, %s53
      %s56 = ssub.s32 1024, 1024
      %57 = vsyncadd [#allocation6], %s56
      %s58 = smul.addr %s54, 64
      %s59 = scalar_lea.hbm %s3, %s58
      %s60 = sshll.u32 [#allocation7], 4
      %s61 = int_to_ptr.vmem [resolvable:$true] %s60
      %66 = dma.hbm_to_vmem [thread:$0]  %s59, 1024, %s61, [#allocation6], 64, 64, 4
    $region17: #{tpu_custom_call.1} parent=1 // pred_fallthru
      _
    // Predicated region
    $region18: #{tpu_custom_call.1} parent=1 // pred_check
      _
    $region19: #{tpu_custom_call.1} parent=1 // pred_check_branch
      %68 = sbr.rel (0) target = $region21
    $region20: #{tpu_custom_call.1} parent=1 // pred_region
      %69 = dma.done [#allocation3], 16
    $region21: #{tpu_custom_call.1} parent=1 // pred_fallthru
      _
    // Predicated region
    $region22: #{tpu_custom_call.1} parent=1 // pred_check
      _
    $region23: #{tpu_custom_call.1} parent=1 // pred_check_branch
      %71 = sbr.rel (0) target = $region25
    $region24: #{tpu_custom_call.1} parent=1 // pred_region
      %72 = dma.done [#allocation6], 1024
    $region25: #{tpu_custom_call.1} parent=1 // pred_fallthru
      _
    // Predicated region
    $region26: #{tpu_custom_call.1} parent=1 // pred_check
      _
    $region27: #{tpu_custom_call.1} parent=1 // pred_check_branch
      %74 = sbr.rel (0) target = $region29
    $region28: #{tpu_custom_call.1} parent=1 // pred_region
      %75 = dma.done [#allocation6], 1024
    $region29: #{tpu_custom_call.1} parent=1 // pred_fallthru
      _
    %s76 = sadd.s32 0, 0
    %p77 = scmp.lt.s32.totalorder %s76, 0
    %s78 = scalar_select %p77, %s76, 0
    %s79 = scalar_lea.vmem %s1, %s78
    %s80 = sadd.s32 0, 0
    %s81 = sadd.s32 0, 0
    %p82 = scmp.lt.s32.totalorder %s81, 0
    %s83 = scalar_select %p82, %s81, 0
    %s84 = scalar_lea.vmem %s1, %s83
    %s85 = sadd.s32 0, 0
    %s86 = sadd.s32 0, 0
    %s87 = smul.u32 16, %s86
    %s88 = sadd.s32 0, 0
    %s89 = smul.u32 16, %s88
    %p91 = scmp.eq.s32.totalorder 0, 0
    // Predicated region
    $region30: #{tpu_custom_call.1} parent=1 // pred_check
      %p92 = pneg %p91
    $region31: #{tpu_custom_call.1} parent=1 // pred_check_branch
      %94 = sbr.rel (%p92) target = $region33
    $region32: #{tpu_custom_call.1} parent=1 // pred_region
      %95 = vst [vmem:[#allocation8] sm:$0xff] 0.0
      %96 = vst [vmem:[#allocation8 + $0x8] sm:$0xff] 0.0
      %97 = vst [vmem:[#allocation9] sm:$0xff] 0.0
      %98 = vst [vmem:[#allocation9 + $0x8] sm:$0xff] 0.0
    $region33: #{tpu_custom_call.1} parent=1 // pred_fallthru
      _
    %v99 = vlaneseq
    %v100 = vshrl.u32 %v99, 7
    %v101 = vadd.s32 %v100, 8
    %v102 = vld [vmem:[#allocation2] sm:$0x1]
    %v103 = vlaneseq
    %v104 = vshrl.u32 %v103, 7
    %v105 = vsub.s32 0, %v104
    %v106 = vrot.slane %v102, %v105
    %vm107 = vcmp.eq.s32.totalorder %v100, %v106
    %vm108 = vcmp.eq.s32.totalorder %v101, %v106
    %v109 = vsel %vm107, 1, 0
    %v110 = vsel %vm108, 1, 0
    %v111 = vcvt.s32.f32 %v109
    %v112 = vcvt.s32.f32 %v110
    %v113 = vpack.c.bf16 %v112, %v111
    %v114 = vld [vmem:[%s84] sm:$0x1]
    %v115 = vlaneseq
    %v116 = vshrl.u32 %v115, 7
    %v117 = vsub.s32 0, %v116
    %v118 = vrot.slane %v114, %v117
    %vm119 = vcmp.eq.s32.totalorder %v100, %v118
    %vm120 = vcmp.eq.s32.totalorder %v101, %v118
    %v121 = vsel %vm119, 1, 0
    %v122 = vsel %vm120, 1, 0
    %v123 = vcvt.s32.f32 %v121
    %v124 = vcvt.s32.f32 %v122
    %v125 = vpack.c.bf16 %v124, %v123
    %v126 = vld [vmem:[#allocation8] sm:$0xff]
    %v127 = vld [vmem:[#allocation8 + $0x8] sm:$0xff]
    %v128 = vld [vmem:[#allocation5] sm:$0xf]
    %v129 = vld [vmem:[#allocation5 + $0x4] sm:$0xf]
    %v130 = vld [vmem:[#allocation5 + $0x8] sm:$0xf]
    %v131 = vld [vmem:[#allocation5 + $0xc] sm:$0xf]
    %v132 = vld [vmem:[#allocation5 + $0x10] sm:$0xf]
    %v133 = vld [vmem:[#allocation5 + $0x14] sm:$0xf]
    %v134 = vld [vmem:[#allocation5 + $0x18] sm:$0xf]
    %v135 = vld [vmem:[#allocation5 + $0x1c] sm:$0xf]
    %v136 = vld [vmem:[#allocation5 + $0x20] sm:$0xf]
    %v137 = vld [vmem:[#allocation5 + $0x24] sm:$0xf]
    %v138 = vld [vmem:[#allocation5 + $0x28] sm:$0xf]
    %v139 = vld [vmem:[#allocation5 + $0x2c] sm:$0xf]
    %v140 = vld [vmem:[#allocation5 + $0x30] sm:$0xf]
    %v141 = vld [vmem:[#allocation5 + $0x34] sm:$0xf]
    %v142 = vld [vmem:[#allocation5 + $0x38] sm:$0xf]
    %v143 = vld [vmem:[#allocation5 + $0x3c] sm:$0xf]
    %v160 = vunpack.c.l.b16 %v128
    %v161 = vunpack.c.l.b16 %v129
    %v162 = vunpack.c.l.b16 %v130
    %v163 = vunpack.c.l.b16 %v131
    %v164 = vunpack.c.l.b16 %v132
    %v165 = vunpack.c.l.b16 %v133
    %v166 = vunpack.c.l.b16 %v134
    %v167 = vunpack.c.l.b16 %v135
    %v168 = vunpack.c.l.b16 %v136
    %v169 = vunpack.c.l.b16 %v137
    %v170 = vunpack.c.l.b16 %v138
    %v171 = vunpack.c.l.b16 %v139
    %v172 = vunpack.c.l.b16 %v140
    %v173 = vunpack.c.l.b16 %v141
    %v174 = vunpack.c.l.b16 %v142
    %v175 = vunpack.c.l.b16 %v143
    %v176 = vpack.c.b16 %v161, %v160
    %v177 = vpack.c.b16 %v163, %v162
    %v178 = vpack.c.b16 %v165, %v164
    %v179 = vpack.c.b16 %v167, %v166
    %v180 = vpack.c.b16 %v169, %v168
    %v181 = vpack.c.b16 %v171, %v170
    %v182 = vpack.c.b16 %v173, %v172
    %v183 = vpack.c.b16 %v175, %v174
    %192 = vmatprep.subr.bf16.mxu0 0
    %193 = vmatpush1.bf16.msra.mxu0 %v183
    %194 = vmatprep.subr.bf16.mxu0 0
    %195 = vmatpush1.bf16.msra.mxu0 %v182
    %196 = vmatprep.subr.bf16.mxu0 0
    %197 = vmatpush1.bf16.msra.mxu0 %v181
    %198 = vmatprep.subr.bf16.mxu0 0
    %199 = vmatpush1.bf16.msra.mxu0 %v180
    %200 = vmatprep.subr.bf16.mxu0 0
    %201 = vmatpush1.bf16.msra.mxu0 %v179
    %202 = vmatprep.subr.bf16.mxu0 0
    %203 = vmatpush1.bf16.msra.mxu0 %v178
    %204 = vmatprep.subr.bf16.mxu0 0
    %205 = vmatpush1.bf16.msra.mxu0 %v177
    %206 = vmatprep.subr.bf16.mxu0 0
    %207 = vmatpush1.bf16.msra.mxu0 %v176
    %208 = vmatprep.subr.bf16.mxu0 0
    %209 = vmatpush2.bf16.msra.mxu0 0
    %210 = vmatprep.subr.bf16.mxu0 0
    %211 = vmatpush2.bf16.msra.mxu0 0
    %212 = vmatprep.subr.bf16.mxu0 0
    %213 = vmatpush2.bf16.msra.mxu0 0
    %214 = vmatprep.subr.bf16.mxu0 0
    %215 = vmatpush2.bf16.msra.mxu0 0
    %216 = vmatprep.subr.bf16.mxu0 0
    %217 = vmatpush2.bf16.msra.mxu0 0
    %218 = vmatprep.subr.bf16.mxu0 0
    %219 = vmatpush2.bf16.msra.mxu0 0
    %220 = vmatprep.subr.bf16.mxu0 0
    %221 = vmatpush2.bf16.msra.mxu0 0
    %222 = vmatprep.subr.bf16.mxu0 0
    %223 = vmatpush2.bf16.msra.mxu0 0
    %224 = vmatprep.mubr.bf16.mxu0 0
    %225 = vmatmul.mubr.bf16.gmra.mxu0 %v113
    %v226 = vpop.f32.mrf.mxu0
    %v227 = vadd.f32 0.0, %v226
    %v228 = vpop.f32.mrf.mxu0
    %v229 = vpop.f32.mrf.mxu0
    %v230 = vadd.f32 0.0, %v229
    %v231 = vpop.f32.mrf.mxu0
    %232 = vdwg.mxu0
    %v233 = vadd.f32 %v126, %v227
    %v234 = vadd.f32 %v127, %v230
    %235 = vst [vmem:[#allocation8] sm:$0xff] %v233
    %236 = vst [vmem:[#allocation8 + $0x8] sm:$0xff] %v234
    %v237 = vld [vmem:[#allocation9] sm:$0xff]
    %v238 = vld [vmem:[#allocation9 + $0x8] sm:$0xff]
    %v239 = vld [vmem:[#allocation7] sm:$0xf]
    %v240 = vld [vmem:[#allocation7 + $0x4] sm:$0xf]
    %v241 = vld [vmem:[#allocation7 + $0x8] sm:$0xf]
    %v242 = vld [vmem:[#allocation7 + $0xc] sm:$0xf]
    %v243 = vld [vmem:[#allocation7 + $0x10] sm:$0xf]
    %v244 = vld [vmem:[#allocation7 + $0x14] sm:$0xf]
    %v245 = vld [vmem:[#allocation7 + $0x18] sm:$0xf]
    %v246 = vld [vmem:[#allocation7 + $0x1c] sm:$0xf]
    %v247 = vld [vmem:[#allocation7 + $0x20] sm:$0xf]
    %v248 = vld [vmem:[#allocation7 + $0x24] sm:$0xf]
    %v249 = vld [vmem:[#allocation7 + $0x28] sm:$0xf]
    %v250 = vld [vmem:[#allocation7 + $0x2c] sm:$0xf]
    %v251 = vld [vmem:[#allocation7 + $0x30] sm:$0xf]
    %v252 = vld [vmem:[#allocation7 + $0x34] sm:$0xf]
    %v253 = vld [vmem:[#allocation7 + $0x38] sm:$0xf]
    %v254 = vld [vmem:[#allocation7 + $0x3c] sm:$0xf]
    %v271 = vunpack.c.l.b16 %v239
    %v272 = vunpack.c.l.b16 %v240
    %v273 = vunpack.c.l.b16 %v241
    %v274 = vunpack.c.l.b16 %v242
    %v275 = vunpack.c.l.b16 %v243
    %v276 = vunpack.c.l.b16 %v244
    %v277 = vunpack.c.l.b16 %v245
    %v278 = vunpack.c.l.b16 %v246
    %v279 = vunpack.c.l.b16 %v247
    %v280 = vunpack.c.l.b16 %v248
    %v281 = vunpack.c.l.b16 %v249
    %v282 = vunpack.c.l.b16 %v250
    %v283 = vunpack.c.l.b16 %v251
    %v284 = vunpack.c.l.b16 %v252
    %v285 = vunpack.c.l.b16 %v253
    %v286 = vunpack.c.l.b16 %v254
    %v287 = vpack.c.b16 %v272, %v271
    %v288 = vpack.c.b16 %v274, %v273
    %v289 = vpack.c.b16 %v276, %v275
    %v290 = vpack.c.b16 %v278, %v277
    %v291 = vpack.c.b16 %v280, %v279
    %v292 = vpack.c.b16 %v282, %v281
    %v293 = vpack.c.b16 %v284, %v283
    %v294 = vpack.c.b16 %v286, %v285
    %303 = vmatprep.subr.bf16.mxu0 0
    %304 = vmatpush1.bf16.msra.mxu0 %v294
    %305 = vmatprep.subr.bf16.mxu0 0
    %306 = vmatpush1.bf16.msra.mxu0 %v293
    %307 = vmatprep.subr.bf16.mxu0 0
    %308 = vmatpush1.bf16.msra.mxu0 %v292
    %309 = vmatprep.subr.bf16.mxu0 0
    %310 = vmatpush1.bf16.msra.mxu0 %v291
    %311 = vmatprep.subr.bf16.mxu0 0
    %312 = vmatpush1.bf16.msra.mxu0 %v290
    %313 = vmatprep.subr.bf16.mxu0 0
    %314 = vmatpush1.bf16.msra.mxu0 %v289
    %315 = vmatprep.subr.bf16.mxu0 0
    %316 = vmatpush1.bf16.msra.mxu0 %v288
    %317 = vmatprep.subr.bf16.mxu0 0
    %318 = vmatpush1.bf16.msra.mxu0 %v287
    %319 = vmatprep.subr.bf16.mxu0 0
    %320 = vmatpush2.bf16.msra.mxu0 0
    %321 = vmatprep.subr.bf16.mxu0 0
    %322 = vmatpush2.bf16.msra.mxu0 0
    %323 = vmatprep.subr.bf16.mxu0 0
    %324 = vmatpush2.bf16.msra.mxu0 0
    %325 = vmatprep.subr.bf16.mxu0 0
    %326 = vmatpush2.bf16.msra.mxu0 0
    %327 = vmatprep.subr.bf16.mxu0 0
    %328 = vmatpush2.bf16.msra.mxu0 0
    %329 = vmatprep.subr.bf16.mxu0 0
    %330 = vmatpush2.bf16.msra.mxu0 0
    %331 = vmatprep.subr.bf16.mxu0 0
    %332 = vmatpush2.bf16.msra.mxu0 0
    %333 = vmatprep.subr.bf16.mxu0 0
    %334 = vmatpush2.bf16.msra.mxu0 0
    %335 = vmatprep.mubr.bf16.mxu0 0
    %336 = vmatmul.mubr.bf16.gmra.mxu0 %v125
    %v337 = vpop.f32.mrf.mxu0
    %v338 = vadd.f32 0.0, %v337
    %v339 = vpop.f32.mrf.mxu0
    %v340 = vpop.f32.mrf.mxu0
    %v341 = vadd.f32 0.0, %v340
    %v342 = vpop.f32.mrf.mxu0
    %343 = vdwg.mxu0
    %v344 = vadd.f32 %v237, %v338
    %v345 = vadd.f32 %v238, %v341
    %346 = vst [vmem:[#allocation9] sm:$0xff] %v344
    %347 = vst [vmem:[#allocation9 + $0x8] sm:$0xff] %v345
    // Predicated region
    $region34: #{tpu_custom_call.1} parent=1 // pred_check
      _
    $region35: #{tpu_custom_call.1} parent=1 // pred_check_branch
      %349 = sbr.rel (0) target = $region37
    $region36: #{tpu_custom_call.1} parent=1 // pred_region
      %s351 = ssub.s32 256, 256
      %352 = vsyncadd [#allocation4], %s351
      %s353 = sshll.u32 [#allocation8], 4
      %s354 = int_to_ptr.vmem [resolvable:$true] %s353
      %359 = dma.vmem_to_hbm [thread:$0]  %s354, 256, %s4, [#allocation4], 128, 128, 8
    $region37: #{tpu_custom_call.1} parent=1 // pred_fallthru
      _
    // Predicated region
    $region38: #{tpu_custom_call.1} parent=1 // pred_check
      _
    $region39: #{tpu_custom_call.1} parent=1 // pred_check_branch
      %361 = sbr.rel (0) target = $region41
    $region40: #{tpu_custom_call.1} parent=1 // pred_region
      %s363 = ssub.s32 256, 256
      %364 = vsyncadd [#allocation10], %s363
      %s365 = sshll.u32 [#allocation9], 4
      %s366 = int_to_ptr.vmem [resolvable:$true] %s365
      %371 = dma.vmem_to_hbm [thread:$0]  %s366, 256, %s5, [#allocation10], 128, 128, 8
    $region41: #{tpu_custom_call.1} parent=1 // pred_fallthru
      _
    // Predicated region
    $region42: #{tpu_custom_call.1} parent=1 // pred_check
      _
    $region43: #{tpu_custom_call.1} parent=1 // pred_check_branch
      %373 = sbr.rel (0) target = $region45
    $region44: #{tpu_custom_call.1} parent=1 // pred_region
      %374 = dma.done [#allocation4], 256
    $region45: #{tpu_custom_call.1} parent=1 // pred_fallthru
      _
    // Predicated region
    $region46: #{tpu_custom_call.1} parent=1 // pred_check
      _
    $region47: #{tpu_custom_call.1} parent=1 // pred_check_branch
      %376 = sbr.rel (0) target = $region49
    $region48: #{tpu_custom_call.1} parent=1 // pred_region
      %377 = dma.done [#allocation10], 256
    $region49: #{tpu_custom_call.1} parent=1 // pred_fallthru
      _
    %378 = vsyncpa [#allocation3], 1
    %379 = vsyncpa [#allocation6], 1
    %380 = vsyncpa [#allocation4], 1
    %381 = vsyncpa [#allocation10], 1

</llo_original>
